<compile_context>
chip_gen: v7x
topology: tpu7x:2x2x1
jax: 0.10.0
libtpu: 0.0.40
codegen_flags: <defaults>
</compile_context>

<pallas_src>
import math

import jax
import jax.numpy as jnp
from jax.experimental import pallas as pl
from jax.experimental.pallas import tpu as pltpu


def _embeddings_kernel(patches_ref, w_ref, add_ref, out_ref):
    """One grid step == `block_b` images.

    patches_ref: (Bt, Spad, Kpad)  zero-padded flattened patches (row 0 = CLS slot)
    w_ref:       (Kpad, H)         flattened conv projection weight
    add_ref:     (Spad, H)         folded additive table (cls/bias/pos)
    out_ref:     (Bt, Spad, H)     output embeddings
    """
    bt, spad, kpad = patches_ref.shape
    h = w_ref.shape[1]
    # Spad % 8 == 0 (wrapper pads), so collapsing the leading dims is a free
    # relayout -> a single 2D MXU matmul for the whole block (one push/drain
    # stream instead of bt, no per-iteration f32 temps kept alive).
    p2d = patches_ref[...].reshape(bt * spad, kpad)
    proj = jnp.dot(p2d, w_ref[...], preferred_element_type=jnp.float32)
    proj = proj.reshape(bt, spad, h)
    out_ref[...] = (proj + add_ref[...][None, :, :]).astype(out_ref.dtype)


def _round_up(x, m):
    return (x + m - 1) // m * m


def _pick_block_b(batch, max_block=8):
    """Largest divisor of `batch` <= max_block keeping grid length >= 2."""
    best = 1
    for d in range(1, min(batch, max_block) + 1):
        if batch % d == 0 and batch // d >= 2:
            best = d
    return best


def embeddings_forward(x, conv_w, conv_b, cls_token, pos_embed, patch_size,
                       *, block_b=None, compute_dtype=jnp.bfloat16,
                       out_dtype=None):
    """ViT Embeddings forward.

    x:         (B, C, H, W) NCHW (matches PyTorch Conv2d input)
    conv_w:    (hidden, C, P, P) Conv2d weight
    conv_b:    (hidden,)         Conv2d bias
    cls_token: (1, 1, hidden)
    pos_embed: (1, num_patches + 1, hidden)   (1d_learned positional table)
    Returns (B, num_patches + 1, hidden) in `out_dtype` (default x.dtype).
    """
    B, C, H, W = x.shape
    P = patch_size
    g = H // P
    N = g * g                                   # num_patches
    hidden = conv_w.shape[0]
    K = C * P * P
    S = N + 1                                   # seq length incl. CLS

    out_dtype = x.dtype if out_dtype is None else out_dtype
    if block_b is None:
        block_b = _pick_block_b(B)
    assert B % block_b == 0, "block_b must divide batch size"

    # Alignment padding: seq -> multiple of 8 (sublane), K -> multiple of 128
    # (lane / MXU contraction dim). Zero padding is numerically free.
    Spad = _round_up(S, 8)
    Kpad = _round_up(K, 128)

    # --- glue (plain JAX, fused by XLA into one copy): extract non-overlapping
    # patches, flatten in (c, ph, pw) order, prepend one all-zero row (CLS slot)
    # and pad to the aligned shape.
    patches = (x.reshape(B, C, g, P, g, P)
                .transpose(0, 2, 4, 1, 3, 5)
                .reshape(B, N, K))
    patches = jnp.pad(patches, ((0, 0), (1, Spad - S), (0, Kpad - K)))
    patches = patches.astype(compute_dtype)                     # (B, Spad, Kpad)

    # Conv2d weight (hidden, C, P, P) -> (Kpad, hidden), bf16 for the MXU.
    w_mat = conv_w.reshape(hidden, K).T.astype(compute_dtype)
    w_mat = jnp.pad(w_mat, ((0, Kpad - K), (0, 0)))              # (Kpad, hidden)

    # Folded additive table (f32): row 0 = cls + pos[0]; rows 1..N = bias + pos.
    pos2d = pos_embed.reshape(S, hidden).astype(jnp.float32)
    add_table = (pos2d
                 .at[0].add(cls_token.reshape(hidden).astype(jnp.float32))
                 .at[1:].add(conv_b.reshape(1, hidden).astype(jnp.float32)))
    add_table = jnp.pad(add_table, ((0, Spad - S), (0, 0)))      # (Spad, hidden)

    cdt_bytes = jnp.dtype(compute_dtype).itemsize
    out_bytes = jnp.dtype(out_dtype).itemsize

    # VMEM budget: double-buffered per-step tiles + single-buffered residents.
    vmem_needed = (2 * block_b * Spad * Kpad * cdt_bytes          # patches tiles
                   + 2 * block_b * Spad * hidden * out_bytes      # output tiles
                   + Kpad * hidden * cdt_bytes                    # weight (x1)
                   + Spad * hidden * 4)                           # add table (x1)
    vmem_limit = int(min(100 * 2**20, max(32 * 2**20, 2 * vmem_needed)))

    cost = pl.CostEstimate(
        flops=2 * B * Spad * Kpad * hidden,
        transcendentals=0,
        bytes_accessed=(B * Spad * Kpad * cdt_bytes
                        + Kpad * hidden * cdt_bytes
                        + Spad * hidden * 4
                        + B * Spad * hidden * out_bytes))

    # NOTE: with the toy hidden_size=32 the output last dim is not lane-dense
    # (masked vst); real ViT hidden (768/1024/1280) is a multiple of 128 and
    # gets unmasked stores.
    out = pl.pallas_call(
        _embeddings_kernel,
        out_shape=jax.ShapeDtypeStruct((B, Spad, hidden), out_dtype),
        grid_spec=pltpu.PrefetchScalarGridSpec(
            num_scalar_prefetch=0,
            grid=(B // block_b,),
            in_specs=[
                pl.BlockSpec((block_b, Spad, Kpad), lambda b: (b, 0, 0)),
                # Grid-invariant operands: single-buffer (never re-fetched).
                pl.BlockSpec((Kpad, hidden), lambda b: (0, 0),
                             pipeline_mode=pl.Buffered(1)),
                pl.BlockSpec((Spad, hidden), lambda b: (0, 0),
                             pipeline_mode=pl.Buffered(1)),
            ],
            out_specs=pl.BlockSpec((block_b, Spad, hidden), lambda b: (b, 0, 0)),
        ),
        # Batch axis is embarrassingly parallel -> megacore sharding on v7x
        # (block_b selection keeps grid length >= 2).
        compiler_params=pltpu.CompilerParams(
            dimension_semantics=("parallel",),
            vmem_limit_bytes=vmem_limit),
        cost_estimate=cost,
    )(patches, w_mat, add_table)

    # TODO(synk): nn.Dropout is identity in eval mode; training-mode dropout
    # (stochastic masking via pltpu.prng_*) is not applied here.
    return out[:, :S, :]


def _trunc_normal(key, shape, std):
    # truncated normal in [-2, 2] std units, like nn.init.trunc_normal_
    return std * jax.random.truncated_normal(key, -2.0, 2.0, shape, jnp.float32)


if __name__ == "__main__":
    # Small config consistent with the module:
    #   image_size=16, patch_size=8 -> num_patches=4, seq=5
    config = dict(
        image_size=16,
        patch_size=8,
        num_channels=4,
        hidden_size=32,
        hidden_dropout_prob=0.0,
        positional_embedding="1d_learned",
        initializer_range=0.02,
    )
    B = 2
    C = config["num_channels"]
    Himg = Wimg = config["image_size"]
    P = config["patch_size"]
    hidden = config["hidden_size"]
    g = Himg // P
    num_patches = g * g

    key = jax.random.PRNGKey(0)
    k_x, k_w, k_b, k_cls, k_pos = jax.random.split(key, 5)

    x = jax.random.normal(k_x, (B, C, Himg, Wimg), jnp.float32)

    # Deterministic synthetic parameters (shapes from the module's __init__).
    fan_in = C * P * P
    conv_w = jax.random.normal(k_w, (hidden, C, P, P), jnp.float32) / math.sqrt(fan_in)
    conv_b = jax.random.normal(k_b, (hidden,), jnp.float32) * 0.01
    cls_token = _trunc_normal(k_cls, (1, 1, hidden), config["initializer_range"])
    pos_embed = _trunc_normal(k_pos, (1, num_patches + 1, hidden),
                              config["initializer_range"])

    out = embeddings_forward(x, conv_w, conv_b, cls_token, pos_embed, P)
    out = jax.block_until_ready(out)
    assert out.shape == (B, num_patches + 1, hidden)

    # --- reference checks in plain JAX ---
    patches_f32 = (x.reshape(B, C, g, P, g, P)
                    .transpose(0, 2, 4, 1, 3, 5)
                    .reshape(B, num_patches, -1))
    w_flat = conv_w.reshape(hidden, -1).T                       # (K, hidden)

    # 1) tight check against a bf16-input / f32-accumulate reference
    #    (same arithmetic the MXU performs inside the kernel).
    patches_bf = patches_f32.astype(jnp.bfloat16).astype(jnp.float32)
    w_bf = w_flat.astype(jnp.bfloat16).astype(jnp.float32)
    proj_bf = patches_bf @ w_bf + conv_b
    ref_bf = jnp.concatenate(
        [jnp.broadcast_to(cls_token, (B, 1, hidden)), proj_bf], axis=1) + pos_embed
    assert jnp.allclose(out, ref_bf, atol=1e-3, rtol=1e-3), \
        float(jnp.max(jnp.abs(out - ref_bf)))

    # 2) loose sanity check against the full-f32 PyTorch-equivalent math.
    proj_f32 = patches_f32 @ w_flat + conv_b
    ref_f32 = jnp.concatenate(
        [jnp.broadcast_to(cls_token, (B, 1, hidden)), proj_f32], axis=1) + pos_embed
    assert jnp.allclose(out, ref_f32, atol=1e-1, rtol=1e-1), \
        float(jnp.max(jnp.abs(out - ref_f32)))

    print("KERNEL_OK")
</pallas_src>

<mosaic_0001>
module attributes {stable_mosaic.version = 11 : i64} {
  func.func @_embeddings_kernel(%arg0: i32, %arg1: memref<1x8x256xbf16, #tpu.memory_space<vmem>>, %arg2: memref<256x32xbf16, #tpu.memory_space<vmem>>, %arg3: memref<8x32xf32, #tpu.memory_space<vmem>>, %arg4: memref<1x8x32xf32, #tpu.memory_space<vmem>>) attributes {dimension_semantics = [#tpu.dimension_semantics<parallel>], iteration_bounds = array<i64: 2>, scalar_prefetch = 0 : i64, scratch_operands = 0 : i64, tpu.core_type = #tpu.core_type<tc>, window_params = [{transform_indices = @transform_0, window_bounds = array<i64: 1, 8, 256>}, {pipeline_mode = #tpu.pipeline_mode<synchronous>, transform_indices = @transform_1, window_bounds = array<i64: 256, 32>}, {pipeline_mode = #tpu.pipeline_mode<synchronous>, transform_indices = @transform_2, window_bounds = array<i64: 8, 32>}, {transform_indices = @transform_3, window_bounds = array<i64: 1, 8, 32>}]} {
    %c0 = arith.constant 0 : index
    %c0_0 = arith.constant 0 : index
    %c0_1 = arith.constant 0 : index
    %0 = vector.load %arg1[%c0, %c0_0, %c0_1] : memref<1x8x256xbf16, #tpu.memory_space<vmem>>, vector<1x8x256xbf16>
    %1 = vector.shape_cast %0 : vector<1x8x256xbf16> to vector<8x256xbf16>
    %c0_2 = arith.constant 0 : index
    %c0_3 = arith.constant 0 : index
    %2 = vector.load %arg2[%c0_2, %c0_3] : memref<256x32xbf16, #tpu.memory_space<vmem>>, vector<256x32xbf16>
    %cst = arith.constant dense<0.000000e+00> : vector<8x32xf32>
    %3 = tpu.matmul %1, %2, %cst {dimension_numbers = #tpu.dot_dimension_numbers<[1], [0], [0], [1], [0, 0, 1, 1], [], []>} : vector<8x256xbf16>, vector<256x32xbf16>, vector<8x32xf32> -> vector<8x32xf32>
    %4 = vector.shape_cast %3 : vector<8x32xf32> to vector<1x8x32xf32>
    %c0_4 = arith.constant 0 : index
    %c0_5 = arith.constant 0 : index
    %5 = vector.load %arg3[%c0_4, %c0_5] : memref<8x32xf32, #tpu.memory_space<vmem>>, vector<8x32xf32>
    %6 = vector.shape_cast %5 : vector<8x32xf32> to vector<1x8x32xf32>
    %7 = arith.addf %4, %6 : vector<1x8x32xf32>
    %c0_6 = arith.constant 0 : index
    %c0_7 = arith.constant 0 : index
    %c0_8 = arith.constant 0 : index
    %8 = vector.load %arg4[%c0_6, %c0_7, %c0_8] : memref<1x8x32xf32, #tpu.memory_space<vmem>>, vector<1x8x32xf32>
    tpu.vector_store %arg4[%c0_6, %c0_7, %c0_8], %7 {strides = array<i32>} : memref<1x8x32xf32, #tpu.memory_space<vmem>>, vector<1x8x32xf32>,
    return
  }
  func.func @transform_0(%arg0: i32) -> (i32, i32, i32) {
    %c0_i32 = arith.constant 0 : i32
    %c0_i32_0 = arith.constant 0 : i32
    %c0_i32_1 = arith.constant 0 : i32
    return %arg0, %c0_i32, %c0_i32_0 : i32, i32, i32
  }
  func.func @transform_1(%arg0: i32) -> (i32, i32) {
    %c0_i32 = arith.constant 0 : i32
    %c0_i32_0 = arith.constant 0 : i32
    %c0_i32_1 = arith.constant 0 : i32
    return %c0_i32, %c0_i32_0 : i32, i32
  }
  func.func @transform_2(%arg0: i32) -> (i32, i32) {
    %c0_i32 = arith.constant 0 : i32
    %c0_i32_0 = arith.constant 0 : i32
    %c0_i32_1 = arith.constant 0 : i32
    return %c0_i32, %c0_i32_0 : i32, i32
  }
  func.func @transform_3(%arg0: i32) -> (i32, i32, i32) {
    %c0_i32 = arith.constant 0 : i32
    %c0_i32_0 = arith.constant 0 : i32
    %c0_i32_1 = arith.constant 0 : i32
    return %arg0, %c0_i32, %c0_i32_0 : i32, i32, i32
  }
}

</mosaic_0001>

<llo_original>
// kernel: tpu_custom_call.1
$region0: #{tpu_custom_call.1}
  #allocation0 [shape = 'u32[]', space=smem, size = 0x4, offset = 0x4, fixed_abs, tag = 'smem constant byte address 0x4 - core index']
  #allocation1 [shape = 'u32[144,128]{1,0:T(1,128)}', space=vmem, size = 0x12000, scoped, tag = 'internal scratch']
  %s0 = inlined_call_operand.vmem [shape: bf16[2,8,256], index: 0, kind: input, shape index: {}]
  %s1 = inlined_call_operand.vmem [shape: bf16[256,32], index: 1, kind: input, shape index: {}]
  %s2 = inlined_call_operand.vmem [shape: f32[8,32], index: 2, kind: input, shape index: {}]
  %s3 = inlined_call_operand.hbm [shape: f32[2,8,32], index: 3, kind: output, shape index: {}]
  %s4 = sld [smem:[#allocation0]]
  $region45: #{tpu_custom_call.1} parent=0
    _
  %s6 = ssub.s32 1, %s4
  %s7 = scalar_select 0, %s6, %s4
  $region1: #{tpu_custom_call.1} parent=0
    #allocation2 [shape = 'u8[8192]{0}', space=vmem, size = 0x2000, scoped, tag = 'output window, operand 0']
    #allocation3 [shape = 's32[2]{0}', space=sflag, size = 0x8, scoped, tag = 'scoped memory for tpu_custom_call.1']
    %8 = vsyncpa [#allocation3], 0
    %s9 = scalar_lea.sflag [#allocation3], 1
    %10 = vsyncpa %s9, 0
    loop: start=0, step=1, limit=4
    $region2: #{tpu_custom_call.1} parent=1 // loop_pre_header
      _
    $region3: #{tpu_custom_call.1} parent=1 // loop_header
      %s12 = sphi 0, %s16
      %p13 = scmp.ge.s32.totalorder %s12, 4
      %s22 = sphi 0, %s24
      %s25 = sphi 0, %s22
      %s26 = sphi 0, %s25
      %s42 = sphi 0, %s26
      %s46 = sphi 0, %s46
      %s48 = sphi 0, %s46
      %s49 = sphi 0, %s48
      %s63 = sphi 0, %s49
      %s67 = sphi 0, %s67
      %s69 = sphi 0, %s67
      %s70 = sphi 0, %s69
      %s84 = sphi 0, %s70
      %s90 = sphi 0, %s92
      %s93 = sphi 0, %s90
      %s94 = sphi 0, %s93
      %s110 = sphi 0, %s94
    $region4: #{tpu_custom_call.1} parent=1 // loop_header_branch
      %15 = sbr.rel (%p13) target = $region8
    $region5: #{tpu_custom_call.1} parent=1 // loop_body
      %s17 = ssub.s32 %s12, 1
      %s18 = ssub.s32 %s12, 2
      %s19 = sadd.s32 %s12, 1
      %s20 = ssub.s32 %s12, %s19
      %p21 = scmp.eq.s32.totalorder %s20, 0
      %s23 = sadd.s32 %s22, 1
      %s24 = scalar_select %p21, %s22, %s23
      %p27 = pneg %p21
      %p28 = scmp.eq.s32.totalorder %s12, 1
      %p29 = por %p27, %p28
      %p30 = scmp.ne.s32.totalorder %s22, %s25
      %p31 = scmp.eq.s32.totalorder %s12, 0
      %p32 = por %p30, %p31
      %p33 = scmp.ne.s32.totalorder %s22, %s25
      %p34 = scmp.eq.s32.totalorder %s17, 1
      %p35 = por %p33, %p34
      %p36 = scmp.ne.s32.totalorder %s25, %s26
      %p37 = scmp.eq.s32.totalorder %s17, 0
      %p38 = por %p36, %p37
      %p39 = scmp.ne.s32.totalorder %s25, %s26
      %p40 = scmp.eq.s32.totalorder %s18, 1
      %p41 = por %p39, %p40
      %p43 = scmp.ne.s32.totalorder %s26, %s42
      %p44 = scmp.eq.s32.totalorder %s18, 0
      %p45 = por %p43, %p44
      %s47 = sadd.s32 %s46, 1
      %p50 = scmp.eq.s32.totalorder %s12, 1
      %p51 = scmp.ne.s32.totalorder %s46, %s48
      %p52 = scmp.eq.s32.totalorder %s12, 0
      %p53 = por %p51, %p52
      %p54 = scmp.ne.s32.totalorder %s46, %s48
      %p55 = scmp.eq.s32.totalorder %s17, 1
      %p56 = por %p54, %p55
      %p57 = scmp.ne.s32.totalorder %s48, %s49
      %p58 = scmp.eq.s32.totalorder %s17, 0
      %p59 = por %p57, %p58
      %p60 = scmp.ne.s32.totalorder %s48, %s49
      %p61 = scmp.eq.s32.totalorder %s18, 1
      %p62 = por %p60, %p61
      %p64 = scmp.ne.s32.totalorder %s49, %s63
      %p65 = scmp.eq.s32.totalorder %s18, 0
      %p66 = por %p64, %p65
      %s68 = sadd.s32 %s67, 1
      %p71 = scmp.eq.s32.totalorder %s12, 1
      %p72 = scmp.ne.s32.totalorder %s67, %s69
      %p73 = scmp.eq.s32.totalorder %s12, 0
      %p74 = por %p72, %p73
      %p75 = scmp.ne.s32.totalorder %s67, %s69
      %p76 = scmp.eq.s32.totalorder %s17, 1
      %p77 = por %p75, %p76
      %p78 = scmp.ne.s32.totalorder %s69, %s70
      %p79 = scmp.eq.s32.totalorder %s17, 0
      %p80 = por %p78, %p79
      %p81 = scmp.ne.s32.totalorder %s69, %s70
      %p82 = scmp.eq.s32.totalorder %s18, 1
      %p83 = por %p81, %p82
      %p85 = scmp.ne.s32.totalorder %s70, %s84
      %p86 = scmp.eq.s32.totalorder %s18, 0
      %p87 = por %p85, %p86
      %s88 = ssub.s32 %s12, %s19
      %p89 = scmp.eq.s32.totalorder %s88, 0
      %s91 = sadd.s32 %s90, 1
      %s92 = scalar_select %p89, %s90, %s91
      %p95 = pneg %p89
      %p96 = scmp.eq.s32.totalorder %s12, 1
      %p97 = por %p95, %p96
      %p98 = scmp.ne.s32.totalorder %s90, %s93
      %p99 = scmp.eq.s32.totalorder %s12, 0
      %p100 = por %p98, %p99
      %p101 = scmp.ne.s32.totalorder %s90, %s93
      %p102 = scmp.eq.s32.totalorder %s17, 1
      %p103 = por %p101, %p102
      %p104 = scmp.ne.s32.totalorder %s93, %s94
      %p105 = scmp.eq.s32.totalorder %s17, 0
      %p106 = por %p104, %p105
      %p107 = scmp.ne.s32.totalorder %s93, %s94
      %p108 = scmp.eq.s32.totalorder %s18, 1
      %p109 = por %p107, %p108
      %p111 = scmp.ne.s32.totalorder %s94, %s110
      %p112 = scmp.eq.s32.totalorder %s18, 0
      %p113 = por %p111, %p112
      %p114 = scmp.le.s32.totalorder 1, %s12
      %p115 = scmp.lt.s32.totalorder %s12, 3
      %p116 = pnand %p114, %p115
      %p117 = pneg %p116
      // Predicated region
      $region9: #{tpu_custom_call.1} parent=5 // pred_check
        _
      $region10: #{tpu_custom_call.1} parent=5 // pred_check_branch
        %119 = sbr.rel (%p116) target = $region12
      $region11: #{tpu_custom_call.1} parent=5 // pred_region
        %s120 = ssub.s32 %s12, 1
        // Predicated region
        $region13: #{tpu_custom_call.1} parent=11 // pred_check
          %p121 = pneg %p59
        $region14: #{tpu_custom_call.1} parent=11 // pred_check_branch
          %123 = sbr.rel (%p121) target = $region16
        $region15: #{tpu_custom_call.1} parent=11 // pred_region
          _
        $region16: #{tpu_custom_call.1} parent=11 // pred_fallthru
          _
        // Predicated region
        $region17: #{tpu_custom_call.1} parent=11 // pred_check
          %p124 = pneg %p80
        $region18: #{tpu_custom_call.1} parent=11 // pred_check_branch
          %126 = sbr.rel (%p124) target = $region20
        $region19: #{tpu_custom_call.1} parent=11 // pred_region
          _
        $region20: #{tpu_custom_call.1} parent=11 // pred_fallthru
          _
      $region12: #{tpu_custom_call.1} parent=5 // pred_fallthru
        _
      %p127 = scmp.lt.s32.totalorder %s12, 2
      // Predicated region
      $region21: #{tpu_custom_call.1} parent=5 // pred_check
        %p128 = pneg %p127
      $region22: #{tpu_custom_call.1} parent=5 // pred_check_branch
        %130 = sbr.rel (%p128) target = $region24
      $region23: #{tpu_custom_call.1} parent=5 // pred_region
        // Predicated region
        $region25: #{tpu_custom_call.1} parent=23 // pred_check
          %p131 = pneg %p32
        $region26: #{tpu_custom_call.1} parent=23 // pred_check_branch
          %133 = sbr.rel (%p131) target = $region28
        $region27: #{tpu_custom_call.1} parent=23 // pred_region
          %p134 = scmp.lt.s32.totalorder %s12, 1
          %s135 = scalar_select %p134, %s12, 1
          %s136 = smul.addr %s135, 2
          %s137 = smul.addr %s136, 4
          %s138 = scalar_lea.vmem %s0, %s137
        $region28: #{tpu_custom_call.1} parent=23 // pred_fallthru
          _
      $region24: #{tpu_custom_call.1} parent=5 // pred_fallthru
        _
      %p139 = scmp.le.s32.totalorder 1, %s12
      %p140 = scmp.lt.s32.totalorder %s12, 3
      %p141 = pnand %p139, %p140
      %p142 = pneg %p141
      // Predicated region
      $region29: #{tpu_custom_call.1} parent=5 // pred_check
        _
      $region30: #{tpu_custom_call.1} parent=5 // pred_check_branch
        %144 = sbr.rel (%p141) target = $region32
      $region31: #{tpu_custom_call.1} parent=5 // pred_region
        %s145 = ssub.s32 %s12, 1
        %p146 = scmp.lt.s32.totalorder %s17, 1
        %s147 = scalar_select %p146, %s17, 1
        %s148 = smul.addr %s147, 2
        %s149 = smul.addr %s148, 4
        %s150 = scalar_lea.vmem %s0, %s149
        %p151 = pneg %p38
        %p152 = pneg %p35
        %p153 = pneg %p59
        %p154 = pneg %p56
        %p155 = pneg %p80
        %p156 = pneg %p77
        %p157 = pneg %p106
        %p158 = pneg %p103
        %s159 = sand.u32 %s93, 1
        %s160 = scalar_lea.sflag [#allocation3], %s159
        %s161 = sand.u32 %s93, 1
        %s162 = smul.addr %s161, 8
        %s163 = scalar_lea.vmem [#allocation2], %s162
        %p164 = scmp.lt.s32.totalorder %s17, 1
        %s165 = scalar_select %p164, %s17, 1
        %s166 = smul.addr %s165, 2
        %s167 = smul.addr %s166, 4
        %s168 = scalar_lea.vmem %s0, %s167
        %v170 = vld [vmem:[%s168] sm:$0xff]
        %v171 = vld [vmem:[%s1] sm:$0xf]
        %v172 = vld [vmem:[%s1 + $0x4] sm:$0xf]
        %v173 = vld [vmem:[%s1 + $0x8] sm:$0xf]
        %v174 = vld [vmem:[%s1 + $0xc] sm:$0xf]
        %v175 = vld [vmem:[%s1 + $0x10] sm:$0xf]
        %v176 = vld [vmem:[%s1 + $0x14] sm:$0xf]
        %v177 = vld [vmem:[%s1 + $0x18] sm:$0xf]
        %v178 = vld [vmem:[%s1 + $0x1c] sm:$0xf]
        %v179 = vld [vmem:[%s1 + $0x20] sm:$0xf]
        %v180 = vld [vmem:[%s1 + $0x24] sm:$0xf]
        %v181 = vld [vmem:[%s1 + $0x28] sm:$0xf]
        %v182 = vld [vmem:[%s1 + $0x2c] sm:$0xf]
        %v183 = vld [vmem:[%s1 + $0x30] sm:$0xf]
        %v184 = vld [vmem:[%s1 + $0x34] sm:$0xf]
        %v185 = vld [vmem:[%s1 + $0x38] sm:$0xf]
        %v186 = vld [vmem:[%s1 + $0x3c] sm:$0xf]
        %v187 = vld [vmem:[%s1 + $0x40] sm:$0xf]
        %v188 = vld [vmem:[%s1 + $0x44] sm:$0xf]
        %v189 = vld [vmem:[%s1 + $0x48] sm:$0xf]
        %v190 = vld [vmem:[%s1 + $0x4c] sm:$0xf]
        %v191 = vld [vmem:[%s1 + $0x50] sm:$0xf]
        %v192 = vld [vmem:[%s1 + $0x54] sm:$0xf]
        %v193 = vld [vmem:[%s1 + $0x58] sm:$0xf]
        %v194 = vld [vmem:[%s1 + $0x5c] sm:$0xf]
        %v195 = vld [vmem:[%s1 + $0x60] sm:$0xf]
        %v196 = vld [vmem:[%s1 + $0x64] sm:$0xf]
        %v197 = vld [vmem:[%s1 + $0x68] sm:$0xf]
        %v198 = vld [vmem:[%s1 + $0x6c] sm:$0xf]
        %v199 = vld [vmem:[%s1 + $0x70] sm:$0xf]
        %v200 = vld [vmem:[%s1 + $0x74] sm:$0xf]
        %v201 = vld [vmem:[%s1 + $0x78] sm:$0xf]
        %v202 = vld [vmem:[%s1 + $0x7c] sm:$0xf]
        %v204 = vunpack.c.l.b16 %v170
        %v205 = vunpack.c.h.b16 %v170
        %v206 = vpack.c.b16 %v204, %v204
        %v207 = vpack.c.b16 %v205, %v205
        %v242 = vunpack.c.l.b16 %v171
        %v243 = vunpack.c.l.b16 %v172
        %v244 = vunpack.c.l.b16 %v173
        %v245 = vunpack.c.l.b16 %v174
        %v246 = vunpack.c.l.b16 %v175
        %v247 = vunpack.c.l.b16 %v176
        %v248 = vunpack.c.l.b16 %v177
        %v249 = vunpack.c.l.b16 %v178
        %v250 = vunpack.c.l.b16 %v179
        %v251 = vunpack.c.l.b16 %v180
        %v252 = vunpack.c.l.b16 %v181
        %v253 = vunpack.c.l.b16 %v182
        %v254 = vunpack.c.l.b16 %v183
        %v255 = vunpack.c.l.b16 %v184
        %v256 = vunpack.c.l.b16 %v185
        %v257 = vunpack.c.l.b16 %v186
        %v258 = vunpack.c.l.b16 %v187
        %v259 = vunpack.c.l.b16 %v188
        %v260 = vunpack.c.l.b16 %v189
        %v261 = vunpack.c.l.b16 %v190
        %v262 = vunpack.c.l.b16 %v191
        %v263 = vunpack.c.l.b16 %v192
        %v264 = vunpack.c.l.b16 %v193
        %v265 = vunpack.c.l.b16 %v194
        %v266 = vunpack.c.l.b16 %v195
        %v267 = vunpack.c.l.b16 %v196
        %v268 = vunpack.c.l.b16 %v197
        %v269 = vunpack.c.l.b16 %v198
        %v270 = vunpack.c.l.b16 %v199
        %v271 = vunpack.c.l.b16 %v200
        %v272 = vunpack.c.l.b16 %v201
        %v273 = vunpack.c.l.b16 %v202
        %v274 = vpack.c.b16 %v243, %v242
        %v275 = vpack.c.b16 %v245, %v244
        %v276 = vpack.c.b16 %v247, %v246
        %v277 = vpack.c.b16 %v249, %v248
        %v278 = vpack.c.b16 %v251, %v250
        %v279 = vpack.c.b16 %v253, %v252
        %v280 = vpack.c.b16 %v255, %v254
        %v281 = vpack.c.b16 %v257, %v256
        %v282 = vpack.c.b16 %v259, %v258
        %v283 = vpack.c.b16 %v261, %v260
        %v284 = vpack.c.b16 %v263, %v262
        %v285 = vpack.c.b16 %v265, %v264
        %v286 = vpack.c.b16 %v267, %v266
        %v287 = vpack.c.b16 %v269, %v268
        %v288 = vpack.c.b16 %v271, %v270
        %v289 = vpack.c.b16 %v273, %v272
        %306 = vmatprep.subr.bf16.mxu0 0
        %307 = vmatpush1.bf16.msra.mxu0 %v274
        %308 = vmatprep.subr.bf16.mxu0 0
        %309 = vmatpush1.bf16.msra.mxu0 %v275
        %310 = vmatprep.subr.bf16.mxu0 0
        %311 = vmatpush1.bf16.msra.mxu0 %v276
        %312 = vmatprep.subr.bf16.mxu0 0
        %313 = vmatpush1.bf16.msra.mxu0 %v277
        %314 = vmatprep.subr.bf16.mxu0 0
        %315 = vmatpush1.bf16.msra.mxu0 %v278
        %316 = vmatprep.subr.bf16.mxu0 0
        %317 = vmatpush1.bf16.msra.mxu0 %v279
        %318 = vmatprep.subr.bf16.mxu0 0
        %319 = vmatpush1.bf16.msra.mxu0 %v280
        %320 = vmatprep.subr.bf16.mxu0 0
        %321 = vmatpush1.bf16.msra.mxu0 %v281
        %322 = vmatprep.subr.bf16.mxu0 0
        %323 = vmatpush1.bf16.msra.mxu0 %v282
        %324 = vmatprep.subr.bf16.mxu0 0
        %325 = vmatpush1.bf16.msra.mxu0 %v283
        %326 = vmatprep.subr.bf16.mxu0 0
        %327 = vmatpush1.bf16.msra.mxu0 %v284
        %328 = vmatprep.subr.bf16.mxu0 0
        %329 = vmatpush1.bf16.msra.mxu0 %v285
        %330 = vmatprep.subr.bf16.mxu0 0
        %331 = vmatpush1.bf16.msra.mxu0 %v286
        %332 = vmatprep.subr.bf16.mxu0 0
        %333 = vmatpush1.bf16.msra.mxu0 %v287
        %334 = vmatprep.subr.bf16.mxu0 0
        %335 = vmatpush1.bf16.msra.mxu0 %v288
        %336 = vmatprep.subr.bf16.mxu0 0
        %337 = vmatpush1.bf16.msra.mxu0 %v289
        %338 = vmatprep.mubr.bf16.mxu0 %v207
        %339 = vmatmul.mubr.bf16.gmra.mrb[0].mxu0 %v206
        %v340 = vpop.f32.mrb[0].mxu0
        %v341 = vadd.f32 0.0, %v340
        %v342 = vpop.f32.mrb[0].mxu0
        %v343 = vpop.f32.mrb[0].mxu0
        %v344 = vpop.f32.mrb[0].mxu0
        %345 = vdwg.mxu0
        %v346 = vld [vmem:[%s2] sm:$0xff]
        %v347 = vadd.f32 %v341, %v346
        %vm348 = vcmask 261120
        %349 = vst.msk [vmem:[%s163] sm:$0xff] %vm348, %v347
        %s350 = sand.u32 %s93, 1
        %s351 = scalar_lea.sflag [#allocation3], %s350
        %s352 = sand.u32 %s93, 1
        %s353 = smul.addr %s352, 8
        %s354 = scalar_lea.vmem [#allocation2], %s353
        // Predicated region
        $region33: #{tpu_custom_call.1} parent=31 // pred_check
          %p355 = pneg %p103
        $region34: #{tpu_custom_call.1} parent=31 // pred_check_branch
          %357 = sbr.rel (%p355) target = $region36
        $region35: #{tpu_custom_call.1} parent=31 // pred_region
          %s359 = ssub.s32 128, 128
          %360 = vsyncadd %s351, %s359
          %s361 = smul.addr %s17, 128
          %s362 = scalar_lea.hbm %s3, %s361
          %s364 = sshll.u32 %s354, 4
          %s365 = int_to_ptr.vmem [resolvable:$true] %s364
          %367 = dma.vmem_to_hbm [thread:$0]  %s365, 128, %s362, %s351
        $region36: #{tpu_custom_call.1} parent=31 // pred_fallthru
          _
      $region32: #{tpu_custom_call.1} parent=5 // pred_fallthru
        _
      %p368 = scmp.le.s32.totalorder 2, %s12
      // Predicated region
      $region37: #{tpu_custom_call.1} parent=5 // pred_check
        %p369 = pneg %p368
      $region38: #{tpu_custom_call.1} parent=5 // pred_check_branch
        %371 = sbr.rel (%p369) target = $region40
      $region39: #{tpu_custom_call.1} parent=5 // pred_region
        %s372 = ssub.s32 %s12, 2
        // Predicated region
        $region41: #{tpu_custom_call.1} parent=39 // pred_check
          %p373 = pneg %p109
        $region42: #{tpu_custom_call.1} parent=39 // pred_check_branch
          %375 = sbr.rel (%p373) target = $region44
        $region43: #{tpu_custom_call.1} parent=39 // pred_region
          %s376 = sand.u32 %s94, 1
          %s377 = scalar_lea.sflag [#allocation3], %s376
          %s378 = sand.u32 %s94, 1
          %s379 = smul.addr %s378, 8
          %s380 = scalar_lea.vmem [#allocation2], %s379
          %381 = dma.done %s377, 128
        $region44: #{tpu_custom_call.1} parent=39 // pred_fallthru
          _
      $region40: #{tpu_custom_call.1} parent=5 // pred_fallthru
        _
    $region6: #{tpu_custom_call.1} parent=1 // loop_footer
      %s16 = sadd.s32 1, %s12
    $region7: #{tpu_custom_call.1} parent=1 // loop_footer_branch
      %11 = sbr.rel target = $region3
    $region8: #{tpu_custom_call.1} parent=1 // loop_exit
      _
    %382 = vsyncpa [#allocation3], 1
    %s383 = scalar_lea.sflag [#allocation3], 1
    %384 = vsyncpa %s383, 1

</llo_original>
